<compile_context>
chip_gen: v6e
topology: v6e:2x2x1
jax: 0.10.0
libtpu: 0.0.40
codegen_flags: <defaults>
</compile_context>

<pallas_src>
import functools

import jax
import jax.numpy as jnp
from jax.experimental import pallas as pl
from jax.experimental.pallas import tpu as pltpu


def _round_up(x, m):
    return (x + m - 1) // m * m


def _multi_model_kernel(
    enc_x_ref,   # (1, b_tile, S, Dp)   embedded src tokens   (compute dtype)
    dec_x_ref,   # (1, b_tile, T, Dp)   embedded prev tokens  (compute dtype)
    enc_w_ref,   # (1, Dp, Dp)          (compute dtype)
    enc_b_ref,   # (1, 1, Dp)           f32
    dec_w_ref,   # (1, Dp, Dp)          (compute dtype)
    dec_b_ref,   # (1, 1, Dp)           f32
    out_w_ref,   # (1, Dp, v_tile)      (compute dtype)
    out_b_ref,   # (1, 1, v_tile)       f32
    logits_ref,  # (1, b_tile*T, v_tile) f32 output block
    dec_h_ref,   # (b_tile*T, Dp) VMEM scratch, persists across the vocab axis
    *,
    b_tile,
    S,
    T,
    compute_dtype,
):
    j = pl.program_id(2)  # vocab-tile index (innermost, "arbitrary")

    # Encoder + decoder hidden state: compute once per (key, batch-tile).
    @pl.when(j == 0)
    def _compute_hidden():
        dp = enc_w_ref.shape[1]

        # ---- encoder: flat 2-D matmul + relu, then mean-pool over src_len ----
        enc_x = enc_x_ref[0].reshape(b_tile * S, dp)             # (b*S, Dp)
        enc_h = jnp.dot(enc_x, enc_w_ref[0],
                        preferred_element_type=jnp.float32)      # (b*S, Dp) f32
        enc_h = jnp.maximum(enc_h + enc_b_ref[0], 0.0)
        # TODO(synk): src_lengths padding mask is not applied; mean-pool uses full S.
        ctx = jnp.mean(enc_h.reshape(b_tile, S, dp), axis=1)     # (b, Dp) f32

        # ---- decoder: add context, flat 2-D matmul + relu ----
        dec_x = dec_x_ref[0].astype(jnp.float32)                 # (b, T, Dp)
        dec_in = (dec_x + ctx[:, None, :]).reshape(b_tile * T, dp)
        dec_in = dec_in.astype(compute_dtype)
        dec_h = jnp.dot(dec_in, dec_w_ref[0],
                        preferred_element_type=jnp.float32)      # (b*T, Dp) f32
        dec_h = jnp.maximum(dec_h + dec_b_ref[0], 0.0)
        dec_h_ref[...] = dec_h.astype(dec_h_ref.dtype)

    # ---- output projection: one lane-dense vocab column tile per grid step ----
    logits = jnp.dot(dec_h_ref[...], out_w_ref[0],
                     preferred_element_type=jnp.float32) + out_b_ref[0]
    logits_ref[0] = logits.astype(logits_ref.dtype)


def fairseq_multi_model_forward(
    params,
    src_tokens,
    src_lengths,
    prev_output_tokens,
    *,
    compute_dtype=jnp.bfloat16,
    b_tile=None,
    v_tile=None,
):
    """Pallas implementation of FairseqMultiModel.forward.

    Returns a dict {key: logits}, logits shape (batch, tgt_len, vocab),
    mirroring the per-key decoder outputs of the PyTorch module.
    """
    keys = params["keys"]
    K = len(keys)
    enc_embed = params["enc_embed"]                     # (K, V_src, D)
    dec_embed = params["dec_embed"]                     # (K, V_tgt, D)
    enc_w, enc_b = params["enc_w"], params["enc_b"]     # (K,D,D), (K,1,D)
    dec_w, dec_b = params["dec_w"], params["dec_b"]     # (K,D,D), (K,1,D)
    out_w, out_b = params["out_w"], params["out_b"]     # (K,D,V), (K,1,V)

    B, S = src_tokens.shape
    _, T = prev_output_tokens.shape
    D = enc_embed.shape[-1]
    V = out_w.shape[-1]

    # Pad lane dims to MXU/vreg-friendly sizes (zero pad keeps math identical).
    Dp = _round_up(D, 128)
    Vp = _round_up(V, 128)

    def pad_last(a, n):
        return jnp.pad(a, [(0, 0)] * (a.ndim - 1) + [(0, n - a.shape[-1])])

    def pad_last2(a, n1, n2):
        return jnp.pad(a, [(0, 0)] * (a.ndim - 2)
                       + [(0, n1 - a.shape[-2]), (0, n2 - a.shape[-1])])

    enc_embed_p = pad_last(enc_embed, Dp)
    dec_embed_p = pad_last(dec_embed, Dp)
    enc_w_p = pad_last2(enc_w, Dp, Dp).astype(compute_dtype)
    dec_w_p = pad_last2(dec_w, Dp, Dp).astype(compute_dtype)
    out_w_p = pad_last2(out_w, Dp, Vp).astype(compute_dtype)
    enc_b_p = pad_last(enc_b, Dp).astype(jnp.float32)   # biases stay f32
    dec_b_p = pad_last(dec_b, Dp).astype(jnp.float32)
    out_b_p = pad_last(out_b, Vp).astype(jnp.float32)

    # Glue: embedding lookups (gather) per key, outside the kernel.
    # TODO(synk): stream the token gathers via in-kernel DMA (memory_space=pl.ANY)
    # to avoid materializing K HBM copies of the activations at large scale.
    enc_x = enc_embed_p[:, src_tokens].astype(compute_dtype)          # (K,B,S,Dp)
    dec_x = dec_embed_p[:, prev_output_tokens].astype(compute_dtype)  # (K,B,T,Dp)

    # Tile-size selection.
    if b_tile is None:
        b_tile = 1
        for cand in range(1, B + 1):
            if B % cand == 0 and cand * max(S, T) <= 512:
                b_tile = cand
    assert B % b_tile == 0, "b_tile must divide batch"
    if v_tile is None:
        v_tile = max(t for t in (128, 256, 512) if Vp % t == 0)
    assert Vp % v_tile == 0 and v_tile % 128 == 0

    NB = B // b_tile
    NV = Vp // v_tile
    grid = (K, NB, NV)
    BT_block = b_tile * T

    kernel = functools.partial(
        _multi_model_kernel, b_tile=b_tile, S=S, T=T, compute_dtype=compute_dtype
    )

    flops = 2 * K * (B * S * Dp * Dp + B * T * Dp * Dp + B * T * Dp * Vp)
    bytes_accessed = (
        enc_x.size * enc_x.dtype.itemsize
        + dec_x.size * dec_x.dtype.itemsize
        + enc_w_p.size * enc_w_p.dtype.itemsize
        + dec_w_p.size * dec_w_p.dtype.itemsize
        + out_w_p.size * out_w_p.dtype.itemsize
        + (enc_b_p.size + dec_b_p.size + out_b_p.size) * 4
        + K * B * T * Vp * 4
    )

    logits_flat = pl.pallas_call(
        kernel,
        out_shape=jax.ShapeDtypeStruct((K, B * T, Vp), jnp.float32),
        grid_spec=pltpu.PrefetchScalarGridSpec(
            num_scalar_prefetch=0,
            grid=grid,
            in_specs=[
                pl.BlockSpec((1, b_tile, S, Dp), lambda k, b, j: (k, b, 0, 0)),  # enc_x
                pl.BlockSpec((1, b_tile, T, Dp), lambda k, b, j: (k, b, 0, 0)),  # dec_x
                pl.BlockSpec((1, Dp, Dp), lambda k, b, j: (k, 0, 0)),            # enc_w
                pl.BlockSpec((1, 1, Dp), lambda k, b, j: (k, 0, 0)),             # enc_b
                pl.BlockSpec((1, Dp, Dp), lambda k, b, j: (k, 0, 0)),            # dec_w
                pl.BlockSpec((1, 1, Dp), lambda k, b, j: (k, 0, 0)),             # dec_b
                pl.BlockSpec((1, Dp, v_tile), lambda k, b, j: (k, 0, j)),        # out_w
                pl.BlockSpec((1, 1, v_tile), lambda k, b, j: (k, 0, j)),         # out_b
            ],
            out_specs=pl.BlockSpec((1, BT_block, v_tile), lambda k, b, j: (k, b, j)),
            scratch_shapes=[pltpu.VMEM((BT_block, Dp), compute_dtype)],
        ),
        compiler_params=pltpu.CompilerParams(
            dimension_semantics=("parallel", "parallel", "arbitrary"),
            vmem_limit_bytes=48 * 1024 * 1024,
        ),
        cost_estimate=pl.CostEstimate(
            flops=flops, transcendentals=0, bytes_accessed=bytes_accessed
        ),
    )(enc_x, dec_x, enc_w_p, enc_b_p, dec_w_p, dec_b_p, out_w_p, out_b_p)

    logits = logits_flat.reshape(K, B, T, Vp)[:, :, :, :V]
    # Per-key decoder outputs, like the PyTorch module's `decoder_outs` dict.
    return {key: logits[i] for i, key in enumerate(keys)}


def init_params(key, lang_pairs, vocab_src, vocab_tgt, embed_dim):
    K = len(lang_pairs)
    ks = jax.random.split(key, 8)
    scale = 0.02
    return {
        "keys": list(lang_pairs),
        "enc_embed": scale * jax.random.normal(ks[0], (K, vocab_src, embed_dim), jnp.float32),
        "dec_embed": scale * jax.random.normal(ks[1], (K, vocab_tgt, embed_dim), jnp.float32),
        "enc_w": scale * jax.random.normal(ks[2], (K, embed_dim, embed_dim), jnp.float32),
        "enc_b": scale * jax.random.normal(ks[3], (K, 1, embed_dim), jnp.float32),
        "dec_w": scale * jax.random.normal(ks[4], (K, embed_dim, embed_dim), jnp.float32),
        "dec_b": scale * jax.random.normal(ks[5], (K, 1, embed_dim), jnp.float32),
        "out_w": scale * jax.random.normal(ks[6], (K, embed_dim, vocab_tgt), jnp.float32),
        "out_b": scale * jax.random.normal(ks[7], (K, 1, vocab_tgt), jnp.float32),
    }


def _reference_forward(params, src_tokens, src_lengths, prev_output_tokens):
    """Plain-JAX f32 reference for correctness checking."""
    outs = {}
    for i, k in enumerate(params["keys"]):
        ex = params["enc_embed"][i][src_tokens]                       # (B,S,D)
        eh = jnp.maximum(ex @ params["enc_w"][i] + params["enc_b"][i], 0.0)
        ctx = jnp.mean(eh, axis=1)                                    # (B,D)
        dx = params["dec_embed"][i][prev_output_tokens] + ctx[:, None, :]
        dh = jnp.maximum(dx @ params["dec_w"][i] + params["dec_b"][i], 0.0)
        outs[k] = dh @ params["out_w"][i] + params["out_b"][i]
    return outs


if __name__ == "__main__":
    import numpy as np

    B, S, T = 2, 8, 8          # batch, src_len, tgt_len
    D = 32                     # embed_dim  (padded to 128 inside the wrapper)
    V_SRC, V_TGT = 48, 160     # vocab sizes (V_TGT padded to 256 -> 2 vocab tiles)
    LANG_PAIRS = ("en-de", "en-fr")

    root = jax.random.PRNGKey(0)
    k_par, k_src, k_prev = jax.random.split(root, 3)

    params = init_params(k_par, LANG_PAIRS, V_SRC, V_TGT, D)
    src_tokens = jax.random.randint(k_src, (B, S), 0, V_SRC, dtype=jnp.int32)
    prev_output_tokens = jax.random.randint(k_prev, (B, T), 0, V_TGT, dtype=jnp.int32)
    src_lengths = jnp.full((B,), S, dtype=jnp.int32)

    ref_outs = _reference_forward(params, src_tokens, src_lengths, prev_output_tokens)

    # f32 path: exercises grid (K=2, NB=2, NV=2) with tight tolerance.
    outs_f32 = fairseq_multi_model_forward(
        params, src_tokens, src_lengths, prev_output_tokens,
        compute_dtype=jnp.float32, b_tile=1, v_tile=128,
    )
    jax.block_until_ready(outs_f32)
    for k in LANG_PAIRS:
        assert outs_f32[k].shape == (B, T, V_TGT)
        np.testing.assert_allclose(
            np.asarray(outs_f32[k]), np.asarray(ref_outs[k]), rtol=1e-5, atol=1e-5
        )

    # bf16 storage / f32 accumulation path (production config), loose tolerance.
    outs_bf16 = fairseq_multi_model_forward(
        params, src_tokens, src_lengths, prev_output_tokens,
        compute_dtype=jnp.bfloat16, b_tile=1, v_tile=128,
    )
    jax.block_until_ready(outs_bf16)
    for k in LANG_PAIRS:
        assert outs_bf16[k].shape == (B, T, V_TGT)
        np.testing.assert_allclose(
            np.asarray(outs_bf16[k]), np.asarray(ref_outs[k]), rtol=2e-2, atol=1e-3
        )

    print("KERNEL_OK")
</pallas_src>

<mosaic_0001>
module attributes {stable_mosaic.version = 11 : i64} {
  func.func @_multi_model_kernel(%arg0: i32, %arg1: i32, %arg2: i32, %arg3: memref<1x1x8x128xf32, #tpu.memory_space<vmem>>, %arg4: memref<1x1x8x128xf32, #tpu.memory_space<vmem>>, %arg5: memref<1x128x128xf32, #tpu.memory_space<vmem>>, %arg6: memref<1x1x128xf32, #tpu.memory_space<vmem>>, %arg7: memref<1x128x128xf32, #tpu.memory_space<vmem>>, %arg8: memref<1x1x128xf32, #tpu.memory_space<vmem>>, %arg9: memref<1x128x128xf32, #tpu.memory_space<vmem>>, %arg10: memref<1x1x128xf32, #tpu.memory_space<vmem>>, %arg11: memref<1x8x128xf32, #tpu.memory_space<vmem>>, %arg12: memref<8x128xf32, #tpu.memory_space<vmem>>) attributes {dimension_semantics = [#tpu.dimension_semantics<parallel>, #tpu.dimension_semantics<parallel>, #tpu.dimension_semantics<arbitrary>], iteration_bounds = array<i64: 2, 2, 2>, scalar_prefetch = 0 : i64, scratch_operands = 1 : i64, tpu.core_type = #tpu.core_type<tc>, window_params = [{transform_indices = @transform_0, window_bounds = array<i64: 1, 1, 8, 128>}, {transform_indices = @transform_1, window_bounds = array<i64: 1, 1, 8, 128>}, {transform_indices = @transform_2, window_bounds = array<i64: 1, 128, 128>}, {transform_indices = @transform_3, window_bounds = array<i64: 1, 1, 128>}, {transform_indices = @transform_4, window_bounds = array<i64: 1, 128, 128>}, {transform_indices = @transform_5, window_bounds = array<i64: 1, 1, 128>}, {transform_indices = @transform_6, window_bounds = array<i64: 1, 128, 128>}, {transform_indices = @transform_7, window_bounds = array<i64: 1, 1, 128>}, {transform_indices = @transform_8, window_bounds = array<i64: 1, 8, 128>}]} {
    %c0_i32 = arith.constant 0 : i32
    %0 = arith.cmpi eq, %arg2, %c0_i32 : i32
    %1 = arith.extui %0 : i1 to i32
    %c0_i32_0 = arith.constant 0 : i32
    %2 = arith.cmpi ne, %1, %c0_i32_0 : i32
    scf.if %2 {
      %c0_11 = arith.constant 0 : index
      %c0_12 = arith.constant 0 : index
      %c0_13 = arith.constant 0 : index
      %c0_14 = arith.constant 0 : index
      %14 = vector.load %arg3[%c0_11, %c0_12, %c0_13, %c0_14] : memref<1x1x8x128xf32, #tpu.memory_space<vmem>>, vector<1x1x8x128xf32>
      %15 = vector.shape_cast %14 : vector<1x1x8x128xf32> to vector<1x8x128xf32>
      %16 = vector.shape_cast %15 : vector<1x8x128xf32> to vector<8x128xf32>
      %c0_15 = arith.constant 0 : index
      %c0_16 = arith.constant 0 : index
      %c0_17 = arith.constant 0 : index
      %17 = vector.load %arg5[%c0_15, %c0_16, %c0_17] : memref<1x128x128xf32, #tpu.memory_space<vmem>>, vector<1x128x128xf32>
      %18 = vector.shape_cast %17 : vector<1x128x128xf32> to vector<128x128xf32>
      %cst_18 = arith.constant dense<0.000000e+00> : vector<8x128xf32>
      %19 = tpu.matmul %16, %18, %cst_18 {dimension_numbers = #tpu.dot_dimension_numbers<[1], [0], [0], [1], [0, 0, 1, 1], [], []>} : vector<8x128xf32>, vector<128x128xf32>, vector<8x128xf32> -> vector<8x128xf32>
      %c0_19 = arith.constant 0 : index
      %c0_20 = arith.constant 0 : index
      %c0_21 = arith.constant 0 : index
      %20 = vector.load %arg6[%c0_19, %c0_20, %c0_21] : memref<1x1x128xf32, #tpu.memory_space<vmem>>, vector<1x1x128xf32>
      %21 = vector.shape_cast %20 : vector<1x1x128xf32> to vector<1x128xf32>
      %22 = vector.broadcast %21 : vector<1x128xf32> to vector<8x128xf32>
      %23 = arith.addf %19, %22 : vector<8x128xf32>
      %cst_22 = arith.constant 0.000000e+00 : f32
      %24 = vector.broadcast %cst_22 : f32 to vector<8x128xf32>
      %25 = arith.maximumf %23, %24 : vector<8x128xf32>
      %26 = vector.shape_cast %25 : vector<8x128xf32> to vector<1x8x128xf32>
      %cst_23 = arith.constant dense<0.000000e+00> : vector<1x128xf32>
      %27 = vector.multi_reduction <add>, %26, %cst_23 [1] : vector<1x8x128xf32> to vector<1x128xf32>
      %cst_24 = arith.constant 8.000000e+00 : f32
      %28 = vector.broadcast %cst_24 : f32 to vector<1x128xf32>
      %29 = arith.divf %27, %28 : vector<1x128xf32>
      %c0_25 = arith.constant 0 : index
      %c0_26 = arith.constant 0 : index
      %c0_27 = arith.constant 0 : index
      %c0_28 = arith.constant 0 : index
      %30 = vector.load %arg4[%c0_25, %c0_26, %c0_27, %c0_28] : memref<1x1x8x128xf32, #tpu.memory_space<vmem>>, vector<1x1x8x128xf32>
      %31 = vector.shape_cast %30 : vector<1x1x8x128xf32> to vector<1x8x128xf32>
      %32 = vector.shape_cast %29 : vector<1x128xf32> to vector<1x1x128xf32>
      %33 = vector.broadcast %32 : vector<1x1x128xf32> to vector<1x8x128xf32>
      %34 = arith.addf %31, %33 : vector<1x8x128xf32>
      %35 = vector.shape_cast %34 : vector<1x8x128xf32> to vector<8x128xf32>
      %c0_29 = arith.constant 0 : index
      %c0_30 = arith.constant 0 : index
      %c0_31 = arith.constant 0 : index
      %36 = vector.load %arg7[%c0_29, %c0_30, %c0_31] : memref<1x128x128xf32, #tpu.memory_space<vmem>>, vector<1x128x128xf32>
      %37 = vector.shape_cast %36 : vector<1x128x128xf32> to vector<128x128xf32>
      %cst_32 = arith.constant dense<0.000000e+00> : vector<8x128xf32>
      %38 = tpu.matmul %35, %37, %cst_32 {dimension_numbers = #tpu.dot_dimension_numbers<[1], [0], [0], [1], [0, 0, 1, 1], [], []>} : vector<8x128xf32>, vector<128x128xf32>, vector<8x128xf32> -> vector<8x128xf32>
      %c0_33 = arith.constant 0 : index
      %c0_34 = arith.constant 0 : index
      %c0_35 = arith.constant 0 : index
      %39 = vector.load %arg8[%c0_33, %c0_34, %c0_35] : memref<1x1x128xf32, #tpu.memory_space<vmem>>, vector<1x1x128xf32>
      %40 = vector.shape_cast %39 : vector<1x1x128xf32> to vector<1x128xf32>
      %41 = vector.broadcast %40 : vector<1x128xf32> to vector<8x128xf32>
      %42 = arith.addf %38, %41 : vector<8x128xf32>
      %cst_36 = arith.constant 0.000000e+00 : f32
      %43 = vector.broadcast %cst_36 : f32 to vector<8x128xf32>
      %44 = arith.maximumf %42, %43 : vector<8x128xf32>
      %c0_37 = arith.constant 0 : index
      %c0_38 = arith.constant 0 : index
      %45 = vector.load %arg12[%c0_37, %c0_38] : memref<8x128xf32, #tpu.memory_space<vmem>>, vector<8x128xf32>
      tpu.vector_store %arg12[%c0_37, %c0_38], %44 {strides = array<i32>} : memref<8x128xf32, #tpu.memory_space<vmem>>, vector<8x128xf32>,
    } else {
    }
    %c0 = arith.constant 0 : index
    %c0_1 = arith.constant 0 : index
    %3 = vector.load %arg12[%c0, %c0_1] : memref<8x128xf32, #tpu.memory_space<vmem>>, vector<8x128xf32>
    %c0_2 = arith.constant 0 : index
    %c0_3 = arith.constant 0 : index
    %c0_4 = arith.constant 0 : index
    %4 = vector.load %arg9[%c0_2, %c0_3, %c0_4] : memref<1x128x128xf32, #tpu.memory_space<vmem>>, vector<1x128x128xf32>
    %5 = vector.shape_cast %4 : vector<1x128x128xf32> to vector<128x128xf32>
    %cst = arith.constant dense<0.000000e+00> : vector<8x128xf32>
    %6 = tpu.matmul %3, %5, %cst {dimension_numbers = #tpu.dot_dimension_numbers<[1], [0], [0], [1], [0, 0, 1, 1], [], []>} : vector<8x128xf32>, vector<128x128xf32>, vector<8x128xf32> -> vector<8x128xf32>
    %c0_5 = arith.constant 0 : index
    %c0_6 = arith.constant 0 : index
    %c0_7 = arith.constant 0 : index
    %7 = vector.load %arg10[%c0_5, %c0_6, %c0_7] : memref<1x1x128xf32, #tpu.memory_space<vmem>>, vector<1x1x128xf32>
    %8 = vector.shape_cast %7 : vector<1x1x128xf32> to vector<1x128xf32>
    %9 = vector.broadcast %8 : vector<1x128xf32> to vector<8x128xf32>
    %10 = arith.addf %6, %9 : vector<8x128xf32>
    %c0_8 = arith.constant 0 : index
    %c0_9 = arith.constant 0 : index
    %c0_10 = arith.constant 0 : index
    %11 = vector.load %arg11[%c0_8, %c0_9, %c0_10] : memref<1x8x128xf32, #tpu.memory_space<vmem>>, vector<1x8x128xf32>
    %12 = vector.shape_cast %11 : vector<1x8x128xf32> to vector<8x128xf32>
    %13 = vector.shape_cast %10 : vector<8x128xf32> to vector<1x8x128xf32>
    tpu.vector_store %arg11[%c0_8, %c0_9, %c0_10], %13 {strides = array<i32>} : memref<1x8x128xf32, #tpu.memory_space<vmem>>, vector<1x8x128xf32>,
    return
  }
  func.func @transform_0(%arg0: i32, %arg1: i32, %arg2: i32) -> (i32, i32, i32, i32) {
    %c0_i32 = arith.constant 0 : i32
    %c0_i32_0 = arith.constant 0 : i32
    %c0_i32_1 = arith.constant 0 : i32
    return %arg0, %arg1, %c0_i32, %c0_i32_0 : i32, i32, i32, i32
  }
  func.func @transform_1(%arg0: i32, %arg1: i32, %arg2: i32) -> (i32, i32, i32, i32) {
    %c0_i32 = arith.constant 0 : i32
    %c0_i32_0 = arith.constant 0 : i32
    %c0_i32_1 = arith.constant 0 : i32
    return %arg0, %arg1, %c0_i32, %c0_i32_0 : i32, i32, i32, i32
  }
  func.func @transform_2(%arg0: i32, %arg1: i32, %arg2: i32) -> (i32, i32, i32) {
    %c0_i32 = arith.constant 0 : i32
    %c0_i32_0 = arith.constant 0 : i32
    %c0_i32_1 = arith.constant 0 : i32
    return %arg0, %c0_i32, %c0_i32_0 : i32, i32, i32
  }
  func.func @transform_3(%arg0: i32, %arg1: i32, %arg2: i32) -> (i32, i32, i32) {
    %c0_i32 = arith.constant 0 : i32
    %c0_i32_0 = arith.constant 0 : i32
    %c0_i32_1 = arith.constant 0 : i32
    return %arg0, %c0_i32, %c0_i32_0 : i32, i32, i32
  }
  func.func @transform_4(%arg0: i32, %arg1: i32, %arg2: i32) -> (i32, i32, i32) {
    %c0_i32 = arith.constant 0 : i32
    %c0_i32_0 = arith.constant 0 : i32
    %c0_i32_1 = arith.constant 0 : i32
    return %arg0, %c0_i32, %c0_i32_0 : i32, i32, i32
  }
  func.func @transform_5(%arg0: i32, %arg1: i32, %arg2: i32) -> (i32, i32, i32) {
    %c0_i32 = arith.constant 0 : i32
    %c0_i32_0 = arith.constant 0 : i32
    %c0_i32_1 = arith.constant 0 : i32
    return %arg0, %c0_i32, %c0_i32_0 : i32, i32, i32
  }
  func.func @transform_6(%arg0: i32, %arg1: i32, %arg2: i32) -> (i32, i32, i32) {
    %c0_i32 = arith.constant 0 : i32
    %c0_i32_0 = arith.constant 0 : i32
    return %arg0, %c0_i32, %arg2 : i32, i32, i32
  }
  func.func @transform_7(%arg0: i32, %arg1: i32, %arg2: i32) -> (i32, i32, i32) {
    %c0_i32 = arith.constant 0 : i32
    %c0_i32_0 = arith.constant 0 : i32
    return %arg0, %c0_i32, %arg2 : i32, i32, i32
  }
  func.func @transform_8(%arg0: i32, %arg1: i32, %arg2: i32) -> (i32, i32, i32) {
    %c0_i32 = arith.constant 0 : i32
    return %arg0, %arg1, %arg2 : i32, i32, i32
  }
}

</mosaic_0001>

<llo_original>
// kernel: tpu_custom_call.1
$region0: #{tpu_custom_call.1}
  #allocation0 [shape = 'u32[]', space=smem, size = 0x4, offset = 0x4, fixed_abs, tag = 'smem constant byte address 0x4 - core index']
  #allocation1 [shape = 'u32[144,128]{1,0:T(1,128)}', space=vmem, size = 0x12000, scoped, tag = 'internal scratch']
  #allocation2 [shape = 'f32[8,128]{1,0:T(8,128)}', space=vmem, size = 0x1000, scoped, tag = 'scratch operand']
  %s0 = inlined_call_operand.hbm [shape: f32[2,2,8,128], index: 0, kind: input, shape index: {}]
  %s1 = inlined_call_operand.hbm [shape: f32[2,2,8,128], index: 1, kind: input, shape index: {}]
  %s2 = inlined_call_operand.hbm [shape: f32[2,128,128], index: 2, kind: input, shape index: {}]
  %s3 = inlined_call_operand.vmem [shape: f32[2,1,128], index: 3, kind: input, shape index: {}]
  %s4 = inlined_call_operand.hbm [shape: f32[2,128,128], index: 4, kind: input, shape index: {}]
  %s5 = inlined_call_operand.vmem [shape: f32[2,1,128], index: 5, kind: input, shape index: {}]
  %s6 = inlined_call_operand.hbm [shape: f32[2,128,256], index: 6, kind: input, shape index: {}]
  %s7 = inlined_call_operand.vmem [shape: f32[2,1,256], index: 7, kind: input, shape index: {}]
  %s8 = inlined_call_operand.hbm [shape: f32[2,16,256], index: 8, kind: output, shape index: {}]
  %s9 = sld [smem:[#allocation0]]
  $region89: #{tpu_custom_call.1} parent=0
    _
  %s11 = ssub.s32 1, %s9
  %s12 = scalar_select 0, %s11, %s9
  $region1: #{tpu_custom_call.1} parent=0
    #allocation3 [shape = 'u8[8192]{0}', space=vmem, size = 0x2000, scoped, tag = 'input window, operand 0']
    #allocation4 [shape = 's32[2]{0}', space=sflag, size = 0x8, scoped, tag = 'scoped memory for tpu_custom_call.1']
    #allocation5 [shape = 's32[2]{0}', space=sflag, size = 0x8, scoped, tag = 'scoped memory for tpu_custom_call.1']
    #allocation6 [shape = 'u8[8192]{0}', space=vmem, size = 0x2000, scoped, tag = 'input window, operand 1']
    #allocation7 [shape = 's32[2]{0}', space=sflag, size = 0x8, scoped, tag = 'scoped memory for tpu_custom_call.1']
    #allocation8 [shape = 'u8[131072]{0}', space=vmem, size = 0x20000, scoped, tag = 'input window, operand 2']
    #allocation9 [shape = 'u8[131072]{0}', space=vmem, size = 0x20000, scoped, tag = 'input window, operand 4']
    #allocation10 [shape = 's32[2]{0}', space=sflag, size = 0x8, scoped, tag = 'scoped memory for tpu_custom_call.1']
    #allocation11 [shape = 'u8[131072]{0}', space=vmem, size = 0x20000, scoped, tag = 'input window, operand 6']
    #allocation12 [shape = 'u8[8192]{0}', space=vmem, size = 0x2000, scoped, tag = 'output window, operand 0']
    %13 = vsyncpa [#allocation4], 0
    %s14 = scalar_lea.sflag [#allocation4], 1
    %15 = vsyncpa %s14, 0
    %16 = vsyncpa [#allocation7], 0
    %s17 = scalar_lea.sflag [#allocation7], 1
    %18 = vsyncpa %s17, 0
    %19 = vsyncpa [#allocation10], 0
    %s20 = scalar_lea.sflag [#allocation10], 1
    %21 = vsyncpa %s20, 0
    %22 = vsyncpa [#allocation5], 0
    %s23 = scalar_lea.sflag [#allocation5], 1
    %24 = vsyncpa %s23, 0
    loop: start=0, step=1, limit=10
    $region2: #{tpu_custom_call.1} parent=1 // loop_pre_header
      _
    $region3: #{tpu_custom_call.1} parent=1 // loop_header
      %s26 = sphi 0, %s30
      %p27 = scmp.ge.s32.totalorder %s26, 10
      %s33 = sphi 0, %s52
      %s34 = sphi 0, %s48
      %s35 = sphi 0, %s44
      %s36 = sphi 0, %s33
      %s37 = sphi 0, %s34
      %s38 = sphi 0, %s35
      %s39 = sphi 0, %s36
      %s40 = sphi 0, %s37
      %s41 = sphi 0, %s38
      %s57 = sphi 0, %s59
      %s60 = sphi 0, %s57
      %s61 = sphi 0, %s60
      %s77 = sphi 0, %s61
      %s85 = sphi 0, %s87
      %s88 = sphi 0, %s85
      %s89 = sphi 0, %s88
      %s105 = sphi 0, %s89
      %s111 = sphi 0, %s113
      %s114 = sphi 0, %s111
      %s115 = sphi 0, %s114
      %s131 = sphi 0, %s115
      %s137 = sphi 0, %s139
      %s140 = sphi 0, %s137
      %s141 = sphi 0, %s140
      %s157 = sphi 0, %s141
      %s163 = sphi 0, %s165
      %s166 = sphi 0, %s163
      %s167 = sphi 0, %s166
      %s183 = sphi 0, %s167
      %s189 = sphi 0, %s191
      %s192 = sphi 0, %s189
      %s193 = sphi 0, %s192
      %s209 = sphi 0, %s193
      %s217 = sphi 0, %s219
      %s220 = sphi 0, %s217
      %s221 = sphi 0, %s220
      %s237 = sphi 0, %s221
      %s245 = sphi 0, %s247
      %s248 = sphi 0, %s245
      %s249 = sphi 0, %s248
      %s265 = sphi 0, %s249
      %s275 = sphi 0, %s277
      %s278 = sphi 0, %s275
      %s279 = sphi 0, %s278
      %s295 = sphi 0, %s279
    $region4: #{tpu_custom_call.1} parent=1 // loop_header_branch
      %29 = sbr.rel (%p27) target = $region8
    $region5: #{tpu_custom_call.1} parent=1 // loop_body
      %s31 = ssub.s32 %s26, 1
      %s32 = ssub.s32 %s26, 2
      %s42 = sadd.s32 1, %s35
      %p43 = scmp.ge.s32.totalorder %s42, 2
      %s44 = scalar_select %p43, 0, %s42
      %s45 = sadd.s32 1, %s34
      %s46 = scalar_select %p43, %s45, %s34
      %p47 = scmp.ge.s32.totalorder %s46, 2
      %s48 = scalar_select %p47, 0, %s46
      %s49 = sadd.s32 1, %s33
      %s50 = scalar_select %p47, %s49, %s33
      %p51 = scmp.ge.s32.totalorder %s50, 2
      %s52 = scalar_select %p51, 0, %s50
      %s53 = ssub.s32 %s33, %s52
      %s54 = ssub.s32 %s34, %s48
      %s55 = sor.u32 %s53, %s54
      %p56 = scmp.eq.s32.totalorder %s55, 0
      %s58 = sadd.s32 %s57, 1
      %s59 = scalar_select %p56, %s57, %s58
      %p62 = pneg %p56
      %p63 = scmp.eq.s32.totalorder %s26, 7
      %p64 = por %p62, %p63
      %p65 = scmp.ne.s32.totalorder %s57, %s60
      %p66 = scmp.eq.s32.totalorder %s26, 0
      %p67 = por %p65, %p66
      %p68 = scmp.ne.s32.totalorder %s57, %s60
      %p69 = scmp.eq.s32.totalorder %s31, 7
      %p70 = por %p68, %p69
      %p71 = scmp.ne.s32.totalorder %s60, %s61
      %p72 = scmp.eq.s32.totalorder %s31, 0
      %p73 = por %p71, %p72
      %p74 = scmp.ne.s32.totalorder %s60, %s61
      %p75 = scmp.eq.s32.totalorder %s32, 7
      %p76 = por %p74, %p75
      %p78 = scmp.ne.s32.totalorder %s61, %s77
      %p79 = scmp.eq.s32.totalorder %s32, 0
      %p80 = por %p78, %p79
      %s81 = ssub.s32 %s33, %s52
      %s82 = ssub.s32 %s34, %s48
      %s83 = sor.u32 %s81, %s82
      %p84 = scmp.eq.s32.totalorder %s83, 0
      %s86 = sadd.s32 %s85, 1
      %s87 = scalar_select %p84, %s85, %s86
      %p90 = pneg %p84
      %p91 = scmp.eq.s32.totalorder %s26, 7
      %p92 = por %p90, %p91
      %p93 = scmp.ne.s32.totalorder %s85, %s88
      %p94 = scmp.eq.s32.totalorder %s26, 0
      %p95 = por %p93, %p94
      %p96 = scmp.ne.s32.totalorder %s85, %s88
      %p97 = scmp.eq.s32.totalorder %s31, 7
      %p98 = por %p96, %p97
      %p99 = scmp.ne.s32.totalorder %s88, %s89
      %p100 = scmp.eq.s32.totalorder %s31, 0
      %p101 = por %p99, %p100
      %p102 = scmp.ne.s32.totalorder %s88, %s89
      %p103 = scmp.eq.s32.totalorder %s32, 7
      %p104 = por %p102, %p103
      %p106 = scmp.ne.s32.totalorder %s89, %s105
      %p107 = scmp.eq.s32.totalorder %s32, 0
      %p108 = por %p106, %p107
      %s109 = ssub.s32 %s33, %s52
      %p110 = scmp.eq.s32.totalorder %s109, 0
      %s112 = sadd.s32 %s111, 1
      %s113 = scalar_select %p110, %s111, %s112
      %p116 = pneg %p110
      %p117 = scmp.eq.s32.totalorder %s26, 7
      %p118 = por %p116, %p117
      %p119 = scmp.ne.s32.totalorder %s111, %s114
      %p120 = scmp.eq.s32.totalorder %s26, 0
      %p121 = por %p119, %p120
      %p122 = scmp.ne.s32.totalorder %s111, %s114
      %p123 = scmp.eq.s32.totalorder %s31, 7
      %p124 = por %p122, %p123
      %p125 = scmp.ne.s32.totalorder %s114, %s115
      %p126 = scmp.eq.s32.totalorder %s31, 0
      %p127 = por %p125, %p126
      %p128 = scmp.ne.s32.totalorder %s114, %s115
      %p129 = scmp.eq.s32.totalorder %s32, 7
      %p130 = por %p128, %p129
      %p132 = scmp.ne.s32.totalorder %s115, %s131
      %p133 = scmp.eq.s32.totalorder %s32, 0
      %p134 = por %p132, %p133
      %s135 = ssub.s32 %s33, %s52
      %p136 = scmp.eq.s32.totalorder %s135, 0
      %s138 = sadd.s32 %s137, 1
      %s139 = scalar_select %p136, %s137, %s138
      %p142 = pneg %p136
      %p143 = scmp.eq.s32.totalorder %s26, 7
      %p144 = por %p142, %p143
      %p145 = scmp.ne.s32.totalorder %s137, %s140
      %p146 = scmp.eq.s32.totalorder %s26, 0
      %p147 = por %p145, %p146
      %p148 = scmp.ne.s32.totalorder %s137, %s140
      %p149 = scmp.eq.s32.totalorder %s31, 7
      %p150 = por %p148, %p149
      %p151 = scmp.ne.s32.totalorder %s140, %s141
      %p152 = scmp.eq.s32.totalorder %s31, 0
      %p153 = por %p151, %p152
      %p154 = scmp.ne.s32.totalorder %s140, %s141
      %p155 = scmp.eq.s32.totalorder %s32, 7
      %p156 = por %p154, %p155
      %p158 = scmp.ne.s32.totalorder %s141, %s157
      %p159 = scmp.eq.s32.totalorder %s32, 0
      %p160 = por %p158, %p159
      %s161 = ssub.s32 %s33, %s52
      %p162 = scmp.eq.s32.totalorder %s161, 0
      %s164 = sadd.s32 %s163, 1
      %s165 = scalar_select %p162, %s163, %s164
      %p168 = pneg %p162
      %p169 = scmp.eq.s32.totalorder %s26, 7
      %p170 = por %p168, %p169
      %p171 = scmp.ne.s32.totalorder %s163, %s166
      %p172 = scmp.eq.s32.totalorder %s26, 0
      %p173 = por %p171, %p172
      %p174 = scmp.ne.s32.totalorder %s163, %s166
      %p175 = scmp.eq.s32.totalorder %s31, 7
      %p176 = por %p174, %p175
      %p177 = scmp.ne.s32.totalorder %s166, %s167
      %p178 = scmp.eq.s32.totalorder %s31, 0
      %p179 = por %p177, %p178
      %p180 = scmp.ne.s32.totalorder %s166, %s167
      %p181 = scmp.eq.s32.totalorder %s32, 7
      %p182 = por %p180, %p181
      %p184 = scmp.ne.s32.totalorder %s167, %s183
      %p185 = scmp.eq.s32.totalorder %s32, 0
      %p186 = por %p184, %p185
      %s187 = ssub.s32 %s33, %s52
      %p188 = scmp.eq.s32.totalorder %s187, 0
      %s190 = sadd.s32 %s189, 1
      %s191 = scalar_select %p188, %s189, %s190
      %p194 = pneg %p188
      %p195 = scmp.eq.s32.totalorder %s26, 7
      %p196 = por %p194, %p195
      %p197 = scmp.ne.s32.totalorder %s189, %s192
      %p198 = scmp.eq.s32.totalorder %s26, 0
      %p199 = por %p197, %p198
      %p200 = scmp.ne.s32.totalorder %s189, %s192
      %p201 = scmp.eq.s32.totalorder %s31, 7
      %p202 = por %p200, %p201
      %p203 = scmp.ne.s32.totalorder %s192, %s193
      %p204 = scmp.eq.s32.totalorder %s31, 0
      %p205 = por %p203, %p204
      %p206 = scmp.ne.s32.totalorder %s192, %s193
      %p207 = scmp.eq.s32.totalorder %s32, 7
      %p208 = por %p206, %p207
      %p210 = scmp.ne.s32.totalorder %s193, %s209
      %p211 = scmp.eq.s32.totalorder %s32, 0
      %p212 = por %p210, %p211
      %s213 = ssub.s32 %s33, %s52
      %s214 = ssub.s32 %s35, %s44
      %s215 = sor.u32 %s213, %s214
      %p216 = scmp.eq.s32.totalorder %s215, 0
      %s218 = sadd.s32 %s217, 1
      %s219 = scalar_select %p216, %s217, %s218
      %p222 = pneg %p216
      %p223 = scmp.eq.s32.totalorder %s26, 7
      %p224 = por %p222, %p223
      %p225 = scmp.ne.s32.totalorder %s217, %s220
      %p226 = scmp.eq.s32.totalorder %s26, 0
      %p227 = por %p225, %p226
      %p228 = scmp.ne.s32.totalorder %s217, %s220
      %p229 = scmp.eq.s32.totalorder %s31, 7
      %p230 = por %p228, %p229
      %p231 = scmp.ne.s32.totalorder %s220, %s221
      %p232 = scmp.eq.s32.totalorder %s31, 0
      %p233 = por %p231, %p232
      %p234 = scmp.ne.s32.totalorder %s220, %s221
      %p235 = scmp.eq.s32.totalorder %s32, 7
      %p236 = por %p234, %p235
      %p238 = scmp.ne.s32.totalorder %s221, %s237
      %p239 = scmp.eq.s32.totalorder %s32, 0
      %p240 = por %p238, %p239
      %s241 = ssub.s32 %s33, %s52
      %s242 = ssub.s32 %s35, %s44
      %s243 = sor.u32 %s241, %s242
      %p244 = scmp.eq.s32.totalorder %s243, 0
      %s246 = sadd.s32 %s245, 1
      %s247 = scalar_select %p244, %s245, %s246
      %p250 = pneg %p244
      %p251 = scmp.eq.s32.totalorder %s26, 7
      %p252 = por %p250, %p251
      %p253 = scmp.ne.s32.totalorder %s245, %s248
      %p254 = scmp.eq.s32.totalorder %s26, 0
      %p255 = por %p253, %p254
      %p256 = scmp.ne.s32.totalorder %s245, %s248
      %p257 = scmp.eq.s32.totalorder %s31, 7
      %p258 = por %p256, %p257
      %p259 = scmp.ne.s32.totalorder %s248, %s249
      %p260 = scmp.eq.s32.totalorder %s31, 0
      %p261 = por %p259, %p260
      %p262 = scmp.ne.s32.totalorder %s248, %s249
      %p263 = scmp.eq.s32.totalorder %s32, 7
      %p264 = por %p262, %p263
      %p266 = scmp.ne.s32.totalorder %s249, %s265
      %p267 = scmp.eq.s32.totalorder %s32, 0
      %p268 = por %p266, %p267
      %s269 = ssub.s32 %s33, %s52
      %s270 = ssub.s32 %s34, %s48
      %s271 = sor.u32 %s269, %s270
      %s272 = ssub.s32 %s35, %s44
      %s273 = sor.u32 %s271, %s272
      %p274 = scmp.eq.s32.totalorder %s273, 0
      %s276 = sadd.s32 %s275, 1
      %s277 = scalar_select %p274, %s275, %s276
      %p280 = pneg %p274
      %p281 = scmp.eq.s32.totalorder %s26, 7
      %p282 = por %p280, %p281
      %p283 = scmp.ne.s32.totalorder %s275, %s278
      %p284 = scmp.eq.s32.totalorder %s26, 0
      %p285 = por %p283, %p284
      %p286 = scmp.ne.s32.totalorder %s275, %s278
      %p287 = scmp.eq.s32.totalorder %s31, 7
      %p288 = por %p286, %p287
      %p289 = scmp.ne.s32.totalorder %s278, %s279
      %p290 = scmp.eq.s32.totalorder %s31, 0
      %p291 = por %p289, %p290
      %p292 = scmp.ne.s32.totalorder %s278, %s279
      %p293 = scmp.eq.s32.totalorder %s32, 7
      %p294 = por %p292, %p293
      %p296 = scmp.ne.s32.totalorder %s279, %s295
      %p297 = scmp.eq.s32.totalorder %s32, 0
      %p298 = por %p296, %p297
      %p299 = scmp.le.s32.totalorder 1, %s26
      %p300 = scmp.lt.s32.totalorder %s26, 9
      %p301 = pnand %p299, %p300
      %p302 = pneg %p301
      // Predicated region
      $region9: #{tpu_custom_call.1} parent=5 // pred_check
        _
      $region10: #{tpu_custom_call.1} parent=5 // pred_check_branch
        %304 = sbr.rel (%p301) target = $region12
      $region11: #{tpu_custom_call.1} parent=5 // pred_region
        %s305 = ssub.s32 %s26, 1
      $region12: #{tpu_custom_call.1} parent=5 // pred_fallthru
        _
      %p306 = scmp.lt.s32.totalorder %s26, 8
      // Predicated region
      $region13: #{tpu_custom_call.1} parent=5 // pred_check
        %p307 = pneg %p306
      $region14: #{tpu_custom_call.1} parent=5 // pred_check_branch
        %309 = sbr.rel (%p307) target = $region16
      $region15: #{tpu_custom_call.1} parent=5 // pred_region
        // Predicated region
        $region17: #{tpu_custom_call.1} parent=15 // pred_check
          %p310 = pneg %p67
        $region18: #{tpu_custom_call.1} parent=15 // pred_check_branch
          %312 = sbr.rel (%p310) target = $region20
        $region19: #{tpu_custom_call.1} parent=15 // pred_region
          %s313 = sand.u32 %s57, 1
          %s314 = scalar_lea.sflag [#allocation4], %s313
          %s315 = sand.u32 %s57, 1
          %s316 = smul.addr %s315, 8
          %s317 = scalar_lea.vmem [#allocation3], %s316
          %s319 = ssub.s32 128, 128
          %320 = vsyncadd %s314, %s319
          %s321 = smul.addr %s33, 2
          %s322 = sadd.s32 %s34, %s321
          %s323 = smul.addr %s322, 128
          %s324 = scalar_lea.hbm %s0, %s323
          %s326 = sshll.u32 %s317, 4
          %s327 = int_to_ptr.vmem [resolvable:$true] %s326
          %329 = dma.hbm_to_vmem [thread:$0]  %s324, 128, %s327, %s314
        $region20: #{tpu_custom_call.1} parent=15 // pred_fallthru
          _
        // Predicated region
        $region21: #{tpu_custom_call.1} parent=15 // pred_check
          %p330 = pneg %p95
        $region22: #{tpu_custom_call.1} parent=15 // pred_check_branch
          %332 = sbr.rel (%p330) target = $region24
        $region23: #{tpu_custom_call.1} parent=15 // pred_region
          %s333 = sand.u32 %s26, 1
          %s334 = scalar_lea.sflag [#allocation7], %s333
          %s335 = sand.u32 %s85, 1
          %s336 = smul.addr %s335, 8
          %s337 = scalar_lea.vmem [#allocation6], %s336
          %s339 = ssub.s32 128, 128
          %340 = vsyncadd %s334, %s339
          %s341 = smul.addr %s33, 2
          %s342 = sadd.s32 %s34, %s341
          %s343 = smul.addr %s342, 128
          %s344 = scalar_lea.hbm %s1, %s343
          %s346 = sshll.u32 %s337, 4
          %s347 = int_to_ptr.vmem [resolvable:$true] %s346
          %349 = dma.hbm_to_vmem [thread:$0]  %s344, 128, %s347, %s334
        $region24: #{tpu_custom_call.1} parent=15 // pred_fallthru
          _
        // Predicated region
        $region25: #{tpu_custom_call.1} parent=15 // pred_check
          %p350 = pneg %p121
        $region26: #{tpu_custom_call.1} parent=15 // pred_check_branch
          %352 = sbr.rel (%p350) target = $region28
        $region27: #{tpu_custom_call.1} parent=15 // pred_region
          %s353 = sand.u32 %s26, 1
          %s354 = scalar_lea.sflag [#allocation7], %s353
          %s355 = sand.u32 %s111, 1
          %s356 = smul.addr %s355, 128
          %s357 = scalar_lea.vmem [#allocation8], %s356
          %s359 = ssub.s32 2048, 2048
          %360 = vsyncadd %s354, %s359
          %s361 = smul.addr %s33, 16
          %s362 = smul.addr %s361, 128
          %s363 = scalar_lea.hbm %s2, %s362
          %s364 = sshll.u32 %s357, 4
          %s365 = int_to_ptr.vmem [resolvable:$true] %s364
          %370 = dma.hbm_to_vmem [thread:$0]  %s363, 2048, %s365, %s354, 128, 128, 8
        $region28: #{tpu_custom_call.1} parent=15 // pred_fallthru
          _
        // Predicated region
        $region29: #{tpu_custom_call.1} parent=15 // pred_check
          %p371 = pneg %p147
        $region30: #{tpu_custom_call.1} parent=15 // pred_check_branch
          %373 = sbr.rel (%p371) target = $region32
        $region31: #{tpu_custom_call.1} parent=15 // pred_region
          %p374 = scmp.lt.s32.totalorder %s33, 1
          %s375 = scalar_select %p374, %s33, 1
          %s376 = scalar_lea.vmem %s3, %s375
        $region32: #{tpu_custom_call.1} parent=15 // pred_fallthru
          _
        // Predicated region
        $region33: #{tpu_custom_call.1} parent=15 // pred_check
          %p377 = pneg %p173
        $region34: #{tpu_custom_call.1} parent=15 // pred_check_branch
          %379 = sbr.rel (%p377) target = $region36
        $region35: #{tpu_custom_call.1} parent=15 // pred_region
          %s380 = sand.u32 %s26, 1
          %s381 = scalar_lea.sflag [#allocation10], %s380
          %s382 = sand.u32 %s163, 1
          %s383 = smul.addr %s382, 128
          %s384 = scalar_lea.vmem [#allocation9], %s383
          %s386 = ssub.s32 2048, 2048
          %387 = vsyncadd %s381, %s386
          %s388 = smul.addr %s33, 16
          %s389 = smul.addr %s388, 128
          %s390 = scalar_lea.hbm %s4, %s389
          %s391 = sshll.u32 %s384, 4
          %s392 = int_to_ptr.vmem [resolvable:$true] %s391
          %397 = dma.hbm_to_vmem [thread:$0]  %s390, 2048, %s392, %s381, 128, 128, 8
        $region36: #{tpu_custom_call.1} parent=15 // pred_fallthru
          _
        // Predicated region
        $region37: #{tpu_custom_call.1} parent=15 // pred_check
          %p398 = pneg %p199
        $region38: #{tpu_custom_call.1} parent=15 // pred_check_branch
          %400 = sbr.rel (%p398) target = $region40
        $region39: #{tpu_custom_call.1} parent=15 // pred_region
          %p401 = scmp.lt.s32.totalorder %s33, 1
          %s402 = scalar_select %p401, %s33, 1
          %s403 = scalar_lea.vmem %s5, %s402
        $region40: #{tpu_custom_call.1} parent=15 // pred_fallthru
          _
        // Predicated region
        $region41: #{tpu_custom_call.1} parent=15 // pred_check
          %p404 = pneg %p227
        $region42: #{tpu_custom_call.1} parent=15 // pred_check_branch
          %406 = sbr.rel (%p404) target = $region44
        $region43: #{tpu_custom_call.1} parent=15 // pred_region
          %s407 = sand.u32 %s26, 1
          %s408 = scalar_lea.sflag [#allocation10], %s407
          %s409 = sand.u32 %s217, 1
          %s410 = smul.addr %s409, 128
          %s411 = scalar_lea.vmem [#allocation11], %s410
          %s413 = ssub.s32 2048, 2048
          %414 = vsyncadd %s408, %s413
          %s415 = smul.addr %s33, 32
          %s416 = sadd.s32 %s35, %s415
          %s417 = smul.addr %s416, 128
          %s418 = scalar_lea.hbm %s6, %s417
          %s419 = sshll.u32 %s411, 4
          %s420 = int_to_ptr.vmem [resolvable:$true] %s419
          %425 = dma.hbm_to_vmem [thread:$0]  %s418, 2048, %s420, %s408, 256, 128, 8
        $region44: #{tpu_custom_call.1} parent=15 // pred_fallthru
          _
        // Predicated region
        $region45: #{tpu_custom_call.1} parent=15 // pred_check
          %p426 = pneg %p255
        $region46: #{tpu_custom_call.1} parent=15 // pred_check_branch
          %428 = sbr.rel (%p426) target = $region48
        $region47: #{tpu_custom_call.1} parent=15 // pred_region
          %p429 = scmp.lt.s32.totalorder %s33, 1
          %s430 = scalar_select %p429, %s33, 1
          %p431 = scmp.lt.s32.totalorder %s35, 1
          %s432 = scalar_select %p431, %s35, 1
          %s433 = smul.addr %s430, 2
          %s434 = sadd.s32 %s432, %s433
          %s435 = scalar_lea.vmem %s7, %s434
        $region48: #{tpu_custom_call.1} parent=15 // pred_fallthru
          _
      $region16: #{tpu_custom_call.1} parent=5 // pred_fallthru
        _
      %p436 = scmp.le.s32.totalorder 1, %s26
      %p437 = scmp.lt.s32.totalorder %s26, 9
      %p438 = pnand %p436, %p437
      %p439 = pneg %p438
      // Predicated region
      $region49: #{tpu_custom_call.1} parent=5 // pred_check
        _
      $region50: #{tpu_custom_call.1} parent=5 // pred_check_branch
        %441 = sbr.rel (%p438) target = $region52
      $region51: #{tpu_custom_call.1} parent=5 // pred_region
        %s442 = ssub.s32 %s26, 1
        %s443 = sand.u32 %s60, 1
        %s444 = scalar_lea.sflag [#allocation4], %s443
        %s445 = sand.u32 %s60, 1
        %s446 = smul.addr %s445, 8
        %s447 = scalar_lea.vmem [#allocation3], %s446
        // Predicated region
        $region53: #{tpu_custom_call.1} parent=51 // pred_check
          %p448 = pneg %p73
        $region54: #{tpu_custom_call.1} parent=51 // pred_check_branch
          %450 = sbr.rel (%p448) target = $region56
        $region55: #{tpu_custom_call.1} parent=51 // pred_region
          %451 = dma.done %s444, 128
        $region56: #{tpu_custom_call.1} parent=51 // pred_fallthru
          _
        %s452 = sand.u32 %s31, 1
        %s453 = scalar_lea.sflag [#allocation7], %s452
        %s454 = sand.u32 %s88, 1
        %s455 = smul.addr %s454, 8
        %s456 = scalar_lea.vmem [#allocation6], %s455
        // Predicated region
        $region57: #{tpu_custom_call.1} parent=51 // pred_check
          %p457 = pneg %p101
        $region58: #{tpu_custom_call.1} parent=51 // pred_check_branch
          %459 = sbr.rel (%p457) target = $region60
        $region59: #{tpu_custom_call.1} parent=51 // pred_region
          %460 = dma.done %s453, 128
        $region60: #{tpu_custom_call.1} parent=51 // pred_fallthru
          _
        %s461 = sand.u32 %s31, 1
        %s462 = scalar_lea.sflag [#allocation7], %s461
        %s463 = sand.u32 %s114, 1
        %s464 = smul.addr %s463, 128
        %s465 = scalar_lea.vmem [#allocation8], %s464
        // Predicated region
        $region61: #{tpu_custom_call.1} parent=51 // pred_check
          %p466 = pneg %p127
        $region62: #{tpu_custom_call.1} parent=51 // pred_check_branch
          %468 = sbr.rel (%p466) target = $region64
        $region63: #{tpu_custom_call.1} parent=51 // pred_region
          %469 = dma.done %s462, 2048
        $region64: #{tpu_custom_call.1} parent=51 // pred_fallthru
          _
        %s470 = sand.u32 %s31, 1
        %s471 = scalar_lea.sflag [#allocation10], %s470
        %s472 = sand.u32 %s166, 1
        %s473 = smul.addr %s472, 128
        %s474 = scalar_lea.vmem [#allocation9], %s473
        // Predicated region
        $region65: #{tpu_custom_call.1} parent=51 // pred_check
          %p475 = pneg %p179
        $region66: #{tpu_custom_call.1} parent=51 // pred_check_branch
          %477 = sbr.rel (%p475) target = $region68
        $region67: #{tpu_custom_call.1} parent=51 // pred_region
          %478 = dma.done %s471, 2048
        $region68: #{tpu_custom_call.1} parent=51 // pred_fallthru
          _
        %s479 = sand.u32 %s31, 1
        %s480 = scalar_lea.sflag [#allocation10], %s479
        %s481 = sand.u32 %s220, 1
        %s482 = smul.addr %s481, 128
        %s483 = scalar_lea.vmem [#allocation11], %s482
        // Predicated region
        $region69: #{tpu_custom_call.1} parent=51 // pred_check
          %p484 = pneg %p233
        $region70: #{tpu_custom_call.1} parent=51 // pred_check_branch
          %486 = sbr.rel (%p484) target = $region72
        $region71: #{tpu_custom_call.1} parent=51 // pred_region
          %487 = dma.done %s480, 2048
        $region72: #{tpu_custom_call.1} parent=51 // pred_fallthru
          _
        %s488 = sand.u32 %s60, 1
        %s489 = scalar_lea.sflag [#allocation4], %s488
        %s490 = sand.u32 %s60, 1
        %s491 = smul.addr %s490, 8
        %s492 = scalar_lea.vmem [#allocation3], %s491
        %p493 = pneg %p73
        %p494 = pneg %p70
        %s495 = sand.u32 %s31, 1
        %s496 = scalar_lea.sflag [#allocation7], %s495
        %s497 = sand.u32 %s88, 1
        %s498 = smul.addr %s497, 8
        %s499 = scalar_lea.vmem [#allocation6], %s498
        %p500 = pneg %p101
        %p501 = pneg %p98
        %s502 = sand.u32 %s31, 1
        %s503 = scalar_lea.sflag [#allocation7], %s502
        %s504 = sand.u32 %s114, 1
        %s505 = smul.addr %s504, 128
        %s506 = scalar_lea.vmem [#allocation8], %s505
        %p507 = pneg %p127
        %p508 = pneg %p124
        %p509 = scmp.lt.s32.totalorder %s36, 1
        %s510 = scalar_select %p509, %s36, 1
        %s511 = scalar_lea.vmem %s3, %s510
        %p512 = pneg %p153
        %p513 = pneg %p150
        %s514 = sand.u32 %s31, 1
        %s515 = scalar_lea.sflag [#allocation10], %s514
        %s516 = sand.u32 %s166, 1
        %s517 = smul.addr %s516, 128
        %s518 = scalar_lea.vmem [#allocation9], %s517
        %p519 = pneg %p179
        %p520 = pneg %p176
        %p521 = scmp.lt.s32.totalorder %s36, 1
        %s522 = scalar_select %p521, %s36, 1
        %s523 = scalar_lea.vmem %s5, %s522
        %p524 = pneg %p205
        %p525 = pneg %p202
        %s526 = sand.u32 %s31, 1
        %s527 = scalar_lea.sflag [#allocation10], %s526
        %s528 = sand.u32 %s220, 1
        %s529 = smul.addr %s528, 128
        %s530 = scalar_lea.vmem [#allocation11], %s529
        %p531 = pneg %p233
        %p532 = pneg %p230
        %p533 = scmp.lt.s32.totalorder %s36, 1
        %s534 = scalar_select %p533, %s36, 1
        %p535 = scmp.lt.s32.totalorder %s38, 1
        %s536 = scalar_select %p535, %s38, 1
        %s537 = smul.addr %s534, 2
        %s538 = sadd.s32 %s536, %s537
        %s539 = scalar_lea.vmem %s7, %s538
        %p540 = pneg %p261
        %p541 = pneg %p258
        %p542 = pneg %p291
        %p543 = pneg %p288
        %s544 = sand.u32 %s278, 1
        %s545 = scalar_lea.sflag [#allocation5], %s544
        %s546 = sand.u32 %s278, 1
        %s547 = smul.addr %s546, 8
        %s548 = scalar_lea.vmem [#allocation12], %s547
        %p549 = scmp.lt.s32.totalorder %s36, 1
        %s550 = scalar_select %p549, %s36, 1
        %s551 = scalar_lea.vmem %s3, %s550
        %p552 = scmp.lt.s32.totalorder %s36, 1
        %s553 = scalar_select %p552, %s36, 1
        %s554 = scalar_lea.vmem %s5, %s553
        %p555 = scmp.lt.s32.totalorder %s36, 1
        %s556 = scalar_select %p555, %s36, 1
        %p557 = scmp.lt.s32.totalorder %s38, 1
        %s558 = scalar_select %p557, %s38, 1
        %s559 = smul.addr %s556, 2
        %s560 = sadd.s32 %s558, %s559
        %s561 = scalar_lea.vmem %s7, %s560
        %p562 = scmp.eq.s32.totalorder %s38, 0
        // Predicated region
        $region73: #{tpu_custom_call.1} parent=51 // pred_check
          %p563 = pneg %p562
        $region74: #{tpu_custom_call.1} parent=51 // pred_check_branch
          %565 = sbr.rel (%p563) target = $region76
        $region75: #{tpu_custom_call.1} parent=51 // pred_region
          %v566 = vld [vmem:[%s447] sm:$0xff]
          %v567 = vld [vmem:[%s465] sm:$0xff]
          %v568 = vld [vmem:[%s465 + $0x8] sm:$0xff]
          %v569 = vld [vmem:[%s465 + $0x10] sm:$0xff]
          %v570 = vld [vmem:[%s465 + $0x18] sm:$0xff]
          %v571 = vld [vmem:[%s465 + $0x20] sm:$0xff]
          %v572 = vld [vmem:[%s465 + $0x28] sm:$0xff]
          %v573 = vld [vmem:[%s465 + $0x30] sm:$0xff]
          %v574 = vld [vmem:[%s465 + $0x38] sm:$0xff]
          %v575 = vld [vmem:[%s465 + $0x40] sm:$0xff]
          %v576 = vld [vmem:[%s465 + $0x48] sm:$0xff]
          %v577 = vld [vmem:[%s465 + $0x50] sm:$0xff]
          %v578 = vld [vmem:[%s465 + $0x58] sm:$0xff]
          %v579 = vld [vmem:[%s465 + $0x60] sm:$0xff]
          %v580 = vld [vmem:[%s465 + $0x68] sm:$0xff]
          %v581 = vld [vmem:[%s465 + $0x70] sm:$0xff]
          %v582 = vld [vmem:[%s465 + $0x78] sm:$0xff]
          %v583 = vld [vmem:[%s551] sm:$0x1]
          %v585 = vlaneseq
          %v586 = vshrl.u32 %v585, 7
          %v587 = vsub.s32 0, %v586
          %v588 = vrot.slane %v583, %v587
          %590 = vmatprep.subr.mxu0 0.0
          %591 = vmatpush1.msra.mxu0 %v582
          %592 = vmatprep.subr.mxu0 0.0
          %593 = vmatpush1.msra.mxu0 %v581
          %594 = vmatprep.subr.mxu0 0.0
          %595 = vmatpush1.msra.mxu0 %v580
          %596 = vmatprep.subr.mxu0 0.0
          %597 = vmatpush1.msra.mxu0 %v579
          %598 = vmatprep.subr.mxu0 0.0
          %599 = vmatpush1.msra.mxu0 %v578
          %600 = vmatprep.subr.mxu0 0.0
          %601 = vmatpush1.msra.mxu0 %v577
          %602 = vmatprep.subr.mxu0 0.0
          %603 = vmatpush1.msra.mxu0 %v576
          %604 = vmatprep.subr.mxu0 0.0
          %605 = vmatpush1.msra.mxu0 %v575
          %606 = vmatprep.subr.mxu0 0.0
          %607 = vmatpush1.msra.mxu0 %v574
          %608 = vmatprep.subr.mxu0 0.0
          %609 = vmatpush1.msra.mxu0 %v573
          %610 = vmatprep.subr.mxu0 0.0
          %611 = vmatpush1.msra.mxu0 %v572
          %612 = vmatprep.subr.mxu0 0.0
          %613 = vmatpush1.msra.mxu0 %v571
          %614 = vmatprep.subr.mxu0 0.0
          %615 = vmatpush1.msra.mxu0 %v570
          %616 = vmatprep.subr.mxu0 0.0
          %617 = vmatpush1.msra.mxu0 %v569
          %618 = vmatprep.subr.mxu0 0.0
          %619 = vmatpush1.msra.mxu0 %v568
          %620 = vmatprep.subr.mxu0 0.0
          %621 = vmatpush1.msra.mxu0 %v567
          %622 = vmatprep.subr.mxu0 0.0
          %623 = vmatpush2.msra.mxu0 0.0
          %624 = vmatprep.subr.mxu0 0.0
          %625 = vmatpush2.msra.mxu0 0.0
          %626 = vmatprep.subr.mxu0 0.0
          %627 = vmatpush2.msra.mxu0 0.0
          %628 = vmatprep.subr.mxu0 0.0
          %629 = vmatpush2.msra.mxu0 0.0
          %630 = vmatprep.subr.mxu0 0.0
          %631 = vmatpush2.msra.mxu0 0.0
          %632 = vmatprep.subr.mxu0 0.0
          %633 = vmatpush2.msra.mxu0 0.0
          %634 = vmatprep.subr.mxu0 0.0
          %635 = vmatpush2.msra.mxu0 0.0
          %636 = vmatprep.subr.mxu0 0.0
          %637 = vmatpush2.msra.mxu0 0.0
          %638 = vmatprep.subr.mxu0 0.0
          %639 = vmatpush2.msra.mxu0 0.0
          %640 = vmatprep.subr.mxu0 0.0
          %641 = vmatpush2.msra.mxu0 0.0
          %642 = vmatprep.subr.mxu0 0.0
          %643 = vmatpush2.msra.mxu0 0.0
          %644 = vmatprep.subr.mxu0 0.0
          %645 = vmatpush2.msra.mxu0 0.0
          %646 = vmatprep.subr.mxu0 0.0
          %647 = vmatpush2.msra.mxu0 0.0
          %648 = vmatprep.subr.mxu0 0.0
          %649 = vmatpush2.msra.mxu0 0.0
          %650 = vmatprep.subr.mxu0 0.0
          %651 = vmatpush2.msra.mxu0 0.0
          %652 = vmatprep.subr.mxu0 0.0
          %653 = vmatpush2.msra.mxu0 0.0
          %654 = vmatprep.mubr.f32.mxu0 0.0
          %655 = vmatmul.mubr.f32.gmra.mxu0 %v566
          %v656 = vpop.f32.mrf.mxu0
          %v657 = vadd.f32 %v588, %v656
          %v658 = vpop.f32.mrf.mxu0
          %659 = vdwg.mxu0
          %v660 = vmax.f32 %v657, 0.0
          %v661 = vrot.slane %v660, 4
          %v662 = vadd.f32 %v660, %v661
          %v663 = vrot.slane %v662, 2
          %v664 = vadd.f32 %v662, %v663
          %v665 = vrot.slane %v664, 1
          %v666 = vadd.f32 %v664, %v665
          %v667 = vrcp.pop 8.0
          %v668 = vmul.f32 %v666, %v667
          %v669 = vld [vmem:[%s456] sm:$0xff]
          %v670 = vadd.f32 %v669, %v668
          %v671 = vld [vmem:[%s474] sm:$0xff]
          %v672 = vld [vmem:[%s474 + $0x8] sm:$0xff]
          %v673 = vld [vmem:[%s474 + $0x10] sm:$0xff]
          %v674 = vld [vmem:[%s474 + $0x18] sm:$0xff]
          %v675 = vld [vmem:[%s474 + $0x20] sm:$0xff]
          %v676 = vld [vmem:[%s474 + $0x28] sm:$0xff]
          %v677 = vld [vmem:[%s474 + $0x30] sm:$0xff]
          %v678 = vld [vmem:[%s474 + $0x38] sm:$0xff]
          %v679 = vld [vmem:[%s474 + $0x40] sm:$0xff]
          %v680 = vld [vmem:[%s474 + $0x48] sm:$0xff]
          %v681 = vld [vmem:[%s474 + $0x50] sm:$0xff]
          %v682 = vld [vmem:[%s474 + $0x58] sm:$0xff]
          %v683 = vld [vmem:[%s474 + $0x60] sm:$0xff]
          %v684 = vld [vmem:[%s474 + $0x68] sm:$0xff]
          %v685 = vld [vmem:[%s474 + $0x70] sm:$0xff]
          %v686 = vld [vmem:[%s474 + $0x78] sm:$0xff]
          %v687 = vld [vmem:[%s554] sm:$0x1]
          %v689 = vlaneseq
          %v690 = vshrl.u32 %v689, 7
          %v691 = vsub.s32 0, %v690
          %v692 = vrot.slane %v687, %v691
          %694 = vmatprep.subr.mxu0 0.0
          %695 = vmatpush1.msra.mxu0 %v686
          %696 = vmatprep.subr.mxu0 0.0
          %697 = vmatpush1.msra.mxu0 %v685
          %698 = vmatprep.subr.mxu0 0.0
          %699 = vmatpush1.msra.mxu0 %v684
          %700 = vmatprep.subr.mxu0 0.0
          %701 = vmatpush1.msra.mxu0 %v683
          %702 = vmatprep.subr.mxu0 0.0
          %703 = vmatpush1.msra.mxu0 %v682
          %704 = vmatprep.subr.mxu0 0.0
          %705 = vmatpush1.msra.mxu0 %v681
          %706 = vmatprep.subr.mxu0 0.0
          %707 = vmatpush1.msra.mxu0 %v680
          %708 = vmatprep.subr.mxu0 0.0
          %709 = vmatpush1.msra.mxu0 %v679
          %710 = vmatprep.subr.mxu0 0.0
          %711 = vmatpush1.msra.mxu0 %v678
          %712 = vmatprep.subr.mxu0 0.0
          %713 = vmatpush1.msra.mxu0 %v677
          %714 = vmatprep.subr.mxu0 0.0
          %715 = vmatpush1.msra.mxu0 %v676
          %716 = vmatprep.subr.mxu0 0.0
          %717 = vmatpush1.msra.mxu0 %v675
          %718 = vmatprep.subr.mxu0 0.0
          %719 = vmatpush1.msra.mxu0 %v674
          %720 = vmatprep.subr.mxu0 0.0
          %721 = vmatpush1.msra.mxu0 %v673
          %722 = vmatprep.subr.mxu0 0.0
          %723 = vmatpush1.msra.mxu0 %v672
          %724 = vmatprep.subr.mxu0 0.0
          %725 = vmatpush1.msra.mxu0 %v671
          %726 = vmatprep.subr.mxu0 0.0
          %727 = vmatpush2.msra.mxu0 0.0
          %728 = vmatprep.subr.mxu0 0.0
          %729 = vmatpush2.msra.mxu0 0.0
          %730 = vmatprep.subr.mxu0 0.0
          %731 = vmatpush2.msra.mxu0 0.0
          %732 = vmatprep.subr.mxu0 0.0
          %733 = vmatpush2.msra.mxu0 0.0
          %734 = vmatprep.subr.mxu0 0.0
          %735 = vmatpush2.msra.mxu0 0.0
          %736 = vmatprep.subr.mxu0 0.0
          %737 = vmatpush2.msra.mxu0 0.0
          %738 = vmatprep.subr.mxu0 0.0
          %739 = vmatpush2.msra.mxu0 0.0
          %740 = vmatprep.subr.mxu0 0.0
          %741 = vmatpush2.msra.mxu0 0.0
          %742 = vmatprep.subr.mxu0 0.0
          %743 = vmatpush2.msra.mxu0 0.0
          %744 = vmatprep.subr.mxu0 0.0
          %745 = vmatpush2.msra.mxu0 0.0
          %746 = vmatprep.subr.mxu0 0.0
          %747 = vmatpush2.msra.mxu0 0.0
          %748 = vmatprep.subr.mxu0 0.0
          %749 = vmatpush2.msra.mxu0 0.0
          %750 = vmatprep.subr.mxu0 0.0
          %751 = vmatpush2.msra.mxu0 0.0
          %752 = vmatprep.subr.mxu0 0.0
          %753 = vmatpush2.msra.mxu0 0.0
          %754 = vmatprep.subr.mxu0 0.0
          %755 = vmatpush2.msra.mxu0 0.0
          %756 = vmatprep.subr.mxu0 0.0
          %757 = vmatpush2.msra.mxu0 0.0
          %758 = vmatprep.mubr.f32.mxu0 0.0
          %759 = vmatmul.mubr.f32.gmra.mxu0 %v670
          %v760 = vpop.f32.mrf.mxu0
          %v761 = vadd.f32 %v692, %v760
          %v762 = vpop.f32.mrf.mxu0
          %763 = vdwg.mxu0
          %v764 = vmax.f32 %v761, 0.0
          %765 = vst [vmem:[#allocation2] sm:$0xff] %v764
        $region76: #{tpu_custom_call.1} parent=51 // pred_fallthru
          _
        %v766 = vld [vmem:[#allocation2] sm:$0xff]
        %v767 = vld [vmem:[%s483] sm:$0xff]
        %v768 = vld [vmem:[%s483 + $0x8] sm:$0xff]
        %v769 = vld [vmem:[%s483 + $0x10] sm:$0xff]
        %v770 = vld [vmem:[%s483 + $0x18] sm:$0xff]
        %v771 = vld [vmem:[%s483 + $0x20] sm:$0xff]
        %v772 = vld [vmem:[%s483 + $0x28] sm:$0xff]
        %v773 = vld [vmem:[%s483 + $0x30] sm:$0xff]
        %v774 = vld [vmem:[%s483 + $0x38] sm:$0xff]
        %v775 = vld [vmem:[%s483 + $0x40] sm:$0xff]
        %v776 = vld [vmem:[%s483 + $0x48] sm:$0xff]
        %v777 = vld [vmem:[%s483 + $0x50] sm:$0xff]
        %v778 = vld [vmem:[%s483 + $0x58] sm:$0xff]
        %v779 = vld [vmem:[%s483 + $0x60] sm:$0xff]
        %v780 = vld [vmem:[%s483 + $0x68] sm:$0xff]
        %v781 = vld [vmem:[%s483 + $0x70] sm:$0xff]
        %v782 = vld [vmem:[%s483 + $0x78] sm:$0xff]
        %v783 = vld [vmem:[%s561] sm:$0x1]
        %v785 = vlaneseq
        %v786 = vshrl.u32 %v785, 7
        %v787 = vsub.s32 0, %v786
        %v788 = vrot.slane %v783, %v787
        %790 = vmatprep.subr.mxu0 0.0
        %791 = vmatpush1.msra.mxu0 %v782
        %792 = vmatprep.subr.mxu0 0.0
        %793 = vmatpush1.msra.mxu0 %v781
        %794 = vmatprep.subr.mxu0 0.0
        %795 = vmatpush1.msra.mxu0 %v780
        %796 = vmatprep.subr.mxu0 0.0
        %797 = vmatpush1.msra.mxu0 %v779
        %798 = vmatprep.subr.mxu0 0.0
        %799 = vmatpush1.msra.mxu0 %v778
        %800 = vmatprep.subr.mxu0 0.0
        %801 = vmatpush1.msra.mxu0 %v777
        %802 = vmatprep.subr.mxu0 0.0
        %803 = vmatpush1.msra.mxu0 %v776
        %804 = vmatprep.subr.mxu0 0.0
        %805 = vmatpush1.msra.mxu0 %v775
        %806 = vmatprep.subr.mxu0 0.0
        %807 = vmatpush1.msra.mxu0 %v774
        %808 = vmatprep.subr.mxu0 0.0
        %809 = vmatpush1.msra.mxu0 %v773
        %810 = vmatprep.subr.mxu0 0.0
        %811 = vmatpush1.msra.mxu0 %v772
        %812 = vmatprep.subr.mxu0 0.0
        %813 = vmatpush1.msra.mxu0 %v771
        %814 = vmatprep.subr.mxu0 0.0
        %815 = vmatpush1.msra.mxu0 %v770
        %816 = vmatprep.subr.mxu0 0.0
        %817 = vmatpush1.msra.mxu0 %v769
        %818 = vmatprep.subr.mxu0 0.0
        %819 = vmatpush1.msra.mxu0 %v768
        %820 = vmatprep.subr.mxu0 0.0
        %821 = vmatpush1.msra.mxu0 %v767
        %822 = vmatprep.subr.mxu0 0.0
        %823 = vmatpush2.msra.mxu0 0.0
        %824 = vmatprep.subr.mxu0 0.0
        %825 = vmatpush2.msra.mxu0 0.0
        %826 = vmatprep.subr.mxu0 0.0
        %827 = vmatpush2.msra.mxu0 0.0
        %828 = vmatprep.subr.mxu0 0.0
        %829 = vmatpush2.msra.mxu0 0.0
        %830 = vmatprep.subr.mxu0 0.0
        %831 = vmatpush2.msra.mxu0 0.0
        %832 = vmatprep.subr.mxu0 0.0
        %833 = vmatpush2.msra.mxu0 0.0
        %834 = vmatprep.subr.mxu0 0.0
        %835 = vmatpush2.msra.mxu0 0.0
        %836 = vmatprep.subr.mxu0 0.0
        %837 = vmatpush2.msra.mxu0 0.0
        %838 = vmatprep.subr.mxu0 0.0
        %839 = vmatpush2.msra.mxu0 0.0
        %840 = vmatprep.subr.mxu0 0.0
        %841 = vmatpush2.msra.mxu0 0.0
        %842 = vmatprep.subr.mxu0 0.0
        %843 = vmatpush2.msra.mxu0 0.0
        %844 = vmatprep.subr.mxu0 0.0
        %845 = vmatpush2.msra.mxu0 0.0
        %846 = vmatprep.subr.mxu0 0.0
        %847 = vmatpush2.msra.mxu0 0.0
        %848 = vmatprep.subr.mxu0 0.0
        %849 = vmatpush2.msra.mxu0 0.0
        %850 = vmatprep.subr.mxu0 0.0
        %851 = vmatpush2.msra.mxu0 0.0
        %852 = vmatprep.subr.mxu0 0.0
        %853 = vmatpush2.msra.mxu0 0.0
        %854 = vmatprep.mubr.f32.mxu0 0.0
        %855 = vmatmul.mubr.f32.gmra.mxu0 %v766
        %v856 = vpop.f32.mrf.mxu0
        %v857 = vadd.f32 %v788, %v856
        %v858 = vpop.f32.mrf.mxu0
        %859 = vdwg.mxu0
        %860 = vst [vmem:[%s548] sm:$0xff] %v857
        %s861 = sand.u32 %s278, 1
        %s862 = scalar_lea.sflag [#allocation5], %s861
        %s863 = sand.u32 %s278, 1
        %s864 = smul.addr %s863, 8
        %s865 = scalar_lea.vmem [#allocation12], %s864
        // Predicated region
        $region77: #{tpu_custom_call.1} parent=51 // pred_check
          %p866 = pneg %p288
        $region78: #{tpu_custom_call.1} parent=51 // pred_check_branch
          %868 = sbr.rel (%p866) target = $region80
        $region79: #{tpu_custom_call.1} parent=51 // pred_region
          %s870 = ssub.s32 128, 128
          %871 = vsyncadd %s862, %s870
          %s872 = smul.addr %s37, 2
          %s873 = sadd.s32 %s38, %s872
          %s874 = smul.addr %s36, 4
          %s875 = sadd.s32 %s873, %s874
          %s876 = smul.addr %s875, 128
          %s877 = scalar_lea.hbm %s8, %s876
          %s879 = sshll.u32 %s865, 4
          %s880 = int_to_ptr.vmem [resolvable:$true] %s879
          %882 = dma.vmem_to_hbm [thread:$0]  %s880, 128, %s877, %s862
        $region80: #{tpu_custom_call.1} parent=51 // pred_fallthru
          _
      $region52: #{tpu_custom_call.1} parent=5 // pred_fallthru
        _
      %p883 = scmp.le.s32.totalorder 2, %s26
      // Predicated region
      $region81: #{tpu_custom_call.1} parent=5 // pred_check
        %p884 = pneg %p883
      $region82: #{tpu_custom_call.1} parent=5 // pred_check_branch
        %886 = sbr.rel (%p884) target = $region84
      $region83: #{tpu_custom_call.1} parent=5 // pred_region
        %s887 = ssub.s32 %s26, 2
        // Predicated region
        $region85: #{tpu_custom_call.1} parent=83 // pred_check
          %p888 = pneg %p294
        $region86: #{tpu_custom_call.1} parent=83 // pred_check_branch
          %890 = sbr.rel (%p888) target = $region88
        $region87: #{tpu_custom_call.1} parent=83 // pred_region
          %s891 = sand.u32 %s279, 1
          %s892 = scalar_lea.sflag [#allocation5], %s891
          %s893 = sand.u32 %s279, 1
          %s894 = smul.addr %s893, 8
          %s895 = scalar_lea.vmem [#allocation12], %s894
          %896 = dma.done %s892, 128
        $region88: #{tpu_custom_call.1} parent=83 // pred_fallthru
          _
      $region84: #{tpu_custom_call.1} parent=5 // pred_fallthru
        _
    $region6: #{tpu_custom_call.1} parent=1 // loop_footer
      %s30 = sadd.s32 1, %s26
    $region7: #{tpu_custom_call.1} parent=1 // loop_footer_branch
      %25 = sbr.rel target = $region3
    $region8: #{tpu_custom_call.1} parent=1 // loop_exit
      _
    %897 = vsyncpa [#allocation4], 1
    %s898 = scalar_lea.sflag [#allocation4], 1
    %899 = vsyncpa %s898, 1
    %900 = vsyncpa [#allocation7], 1
    %s901 = scalar_lea.sflag [#allocation7], 1
    %902 = vsyncpa %s901, 1
    %903 = vsyncpa [#allocation10], 1
    %s904 = scalar_lea.sflag [#allocation10], 1
    %905 = vsyncpa %s904, 1
    %906 = vsyncpa [#allocation5], 1
    %s907 = scalar_lea.sflag [#allocation5], 1
    %908 = vsyncpa %s907, 1

</llo_original>
